<compile_context>
chip_gen: v7x
topology: tpu7x:2x2x1
jax: 0.10.0
libtpu: 0.0.40
codegen_flags: <defaults>
</compile_context>

<pallas_src>
import functools
import math

import jax
import jax.numpy as jnp
from jax.experimental import pallas as pl
from jax.experimental.pallas import tpu as pltpu

_LN_EPS = 1e-5
_GELU_C = math.sqrt(2.0 / math.pi)


def _gelu(x):
    # tanh-approximate GELU (lowers to the EUP tanh); differs from HF's
    # exact-erf "gelu" by ~1e-3, well inside the test tolerance.
    return 0.5 * x * (1.0 + jnp.tanh(_GELU_C * (x + 0.044715 * x * x * x)))


def _layer_norm(x, gamma, beta):
    mu = jnp.mean(x, axis=-1, keepdims=True)
    xc = x - mu
    var = jnp.mean(xc * xc, axis=-1, keepdims=True)
    return xc * jax.lax.rsqrt(var + _LN_EPS) * gamma + beta


def _pick_tile(n, candidates=(512, 256, 128, 64, 32, 16, 8)):
    # Largest tile (multiple of 8 sublanes) that divides n; fall back to the
    # full extent (full-dim blocks are exempt from the (8,128) rule).
    for t in candidates:
        if t <= n and n % t == 0:
            return t
    return n


# ---------------------------------------------------------------------------
# Kernel 1: positional conv embedding + residual add + encoder LayerNorm
#   grid = (row_tiles, K taps); taps accumulate into VMEM scratch.
# ---------------------------------------------------------------------------
def _embed_kernel(xtap_ref, xres_ref, wconv_ref, bconv_ref, lng_ref, lnb_ref,
                  out_ref, acc_ref):
    k = pl.program_id(1)

    @pl.when(k == 0)
    def _():
        acc_ref[...] = jnp.zeros_like(acc_ref)

    xk = xtap_ref[...]                       # (tile_n, H) bf16 : rows of tap k
    w = wconv_ref[...]                       # (G, cin, cin) bf16 : tap-k grouped weight
    groups, cin, _ = w.shape
    parts = [
        jnp.dot(xk[:, g * cin:(g + 1) * cin], w[g],
                preferred_element_type=jnp.float32)
        for g in range(groups)               # static per-group matmuls (no dense expansion)
    ]
    acc_ref[...] += jnp.concatenate(parts, axis=-1)

    @pl.when(k == pl.num_programs(1) - 1)
    def _():
        pos = _gelu(acc_ref[...] + bconv_ref[...])
        out_ref[...] = _layer_norm(xres_ref[...] + pos, lng_ref[...], lnb_ref[...])


# ---------------------------------------------------------------------------
# Kernel 2: the whole stack of Wav2Vec2EncoderLayers.
#   grid = (L layers, T/tq query tiles); layer weights stream over the layer
#   axis; the activation is carried in the resident output block; K/V for the
#   current layer live in bf16 VMEM scratch.
# ---------------------------------------------------------------------------
def _layer_stack_kernel(h_ref, wq_ref, bq_ref, wk_ref, bk_ref, wv_ref, bv_ref,
                        wo_ref, bo_ref, ln1g_ref, ln1b_ref,
                        w1_ref, b1_ref, w2_ref, b2_ref, ln2g_ref, ln2b_ref,
                        out_ref, kbuf, vbuf, *, num_heads, tq):
    l = pl.program_id(0)
    r = pl.program_id(1)
    B, T, H = out_ref.shape
    d = H // num_heads
    scale = 1.0 / math.sqrt(d)

    # Load the layer-0 input into the carried (resident) activation once.
    @pl.when(jnp.logical_and(l == 0, r == 0))
    def _():
        out_ref[...] = h_ref[...]

    # Project K / V for the whole sequence once per layer, before any query
    # tile of this layer overwrites its rows of the carried activation.
    @pl.when(r == 0)
    def _():
        hs = out_ref[...].reshape(B * T, H).astype(jnp.bfloat16)
        kk = jnp.dot(hs, wk_ref[...], preferred_element_type=jnp.float32) + bk_ref[...]
        vv = jnp.dot(hs, wv_ref[...], preferred_element_type=jnp.float32) + bv_ref[...]
        kbuf[...] = kk.reshape(B, T, H).astype(jnp.bfloat16)
        vbuf[...] = vv.reshape(B, T, H).astype(jnp.bfloat16)

    start = pl.multiple_of(r * tq, tq)
    hq = out_ref[:, pl.ds(start, tq), :]                    # (B, tq, H) f32
    hq2 = hq.reshape(B * tq, H)

    # --- self-attention (HF scales q_proj output, bias included) ---
    q2 = (jnp.dot(hq2.astype(jnp.bfloat16), wq_ref[...],
                  preferred_element_type=jnp.float32) + bq_ref[...]) * scale
    q = q2.reshape(B, tq, H).astype(jnp.bfloat16)
    k = kbuf[...]                                           # (B, T, H) bf16
    v = vbuf[...]
    # TODO(synk): attention_mask handling (zeroing masked frames + additive
    # score bias) is not implemented; only the attention_mask=None path.

    ctx_parts = []
    for hd in range(num_heads):    # static per-head loop (multi-batch-dim dot
        lo, hi = hd * d, (hd + 1) * d   # is not relied upon for lowering safety)
        s = jnp.einsum('bqd,bkd->bqk', q[:, :, lo:hi], k[:, :, lo:hi],
                       preferred_element_type=jnp.float32)   # (B, tq, T) f32
        s = s - jnp.max(s, axis=-1, keepdims=True)
        p = jnp.exp(s)
        p = p * pl.reciprocal(jnp.sum(p, axis=-1, keepdims=True), approx=True)
        ctx_parts.append(
            jnp.einsum('bqk,bkd->bqd', p.astype(jnp.bfloat16), v[:, :, lo:hi],
                       preferred_element_type=jnp.float32))
    ctx = jnp.concatenate(ctx_parts, axis=-1).reshape(B * tq, H)
    attn = jnp.dot(ctx.astype(jnp.bfloat16), wo_ref[...],
                   preferred_element_type=jnp.float32) + bo_ref[...]

    # --- post-LN + feed-forward + post-LN ---
    h1 = _layer_norm(hq2 + attn, ln1g_ref[...], ln1b_ref[...])
    ff = _gelu(jnp.dot(h1.astype(jnp.bfloat16), w1_ref[...],
                       preferred_element_type=jnp.float32) + b1_ref[...])
    ff = jnp.dot(ff.astype(jnp.bfloat16), w2_ref[...],
                 preferred_element_type=jnp.float32) + b2_ref[...]
    h2 = _layer_norm(h1 + ff, ln2g_ref[...], ln2b_ref[...])

    # Carry to the next layer (resident output block; single HBM flush at end).
    out_ref[:, pl.ds(start, tq), :] = h2.reshape(B, tq, H)


# ---------------------------------------------------------------------------
# Wrapper (glue): padding/tap layout, weight stacking + bf16 casts, pallas_calls
# ---------------------------------------------------------------------------
def wav2vec2_encoder_forward(x, params, *, num_heads):
    """Pallas forward of Wav2vec2Encoder (inference; attention_mask=None path)."""
    B, T, H = x.shape
    x = x.astype(jnp.float32)
    N = B * T

    conv_w = params['conv_w']                 # (K, G, cin, cin) grouped weight
    K, G, cin, _ = conv_w.shape
    pad = K // 2

    # ---- glue: aligned per-tap slabs (SamePad convention: out[t] = sum_k xpad[t+k]·W[k]).
    # Note: this duplicates the activation K times in HBM in exchange for
    # aligned, grid-streamed tap DMAs inside the kernel.
    xpad = jnp.pad(x, ((0, 0), (pad, pad), (0, 0)))
    xtaps = jnp.stack([xpad[:, k:k + T, :].reshape(N, H) for k in range(K)],
                      axis=0).astype(jnp.bfloat16)          # (K, N, H)
    x_flat = x.reshape(N, H)                                # residual (f32)
    conv_w_b16 = conv_w.astype(jnp.bfloat16)

    tile_n = _pick_tile(N)
    h = pl.pallas_call(
        _embed_kernel,
        out_shape=jax.ShapeDtypeStruct((N, H), jnp.float32),
        grid=(N // tile_n, K),
        in_specs=[
            pl.BlockSpec((None, tile_n, H), lambda r, k: (k, r, 0)),     # tap slab
            pl.BlockSpec((tile_n, H), lambda r, k: (r, 0)),              # residual
            pl.BlockSpec((None, G, cin, cin), lambda r, k: (k, 0, 0, 0)),
            pl.BlockSpec((1, H), lambda r, k: (0, 0)),                   # conv bias
            pl.BlockSpec((1, H), lambda r, k: (0, 0)),                   # ln gamma
            pl.BlockSpec((1, H), lambda r, k: (0, 0)),                   # ln beta
        ],
        out_specs=pl.BlockSpec((tile_n, H), lambda r, k: (r, 0)),
        scratch_shapes=[pltpu.VMEM((tile_n, H), jnp.float32)],
        compiler_params=pltpu.CompilerParams(
            dimension_semantics=("parallel", "arbitrary"),
            vmem_limit_bytes=64 * 1024 * 1024),
    )(xtaps, x_flat, conv_w_b16, params['conv_b'], params['ln_g'], params['ln_b'])
    h = h.reshape(B, T, H)

    # ---- glue: stack per-layer weights so ONE pallas_call streams the stack.
    layers = params['layers']
    L = len(layers)

    def stack(name, dtype=None):
        a = jnp.stack([lp[name] for lp in layers], axis=0)
        return a.astype(dtype) if dtype is not None else a

    wq = stack('wq', jnp.bfloat16); wk = stack('wk', jnp.bfloat16)
    wv = stack('wv', jnp.bfloat16); wo = stack('wo', jnp.bfloat16)
    w1 = stack('w1', jnp.bfloat16); w2 = stack('w2', jnp.bfloat16)
    bq = stack('bq'); bk = stack('bk'); bv = stack('bv'); bo = stack('bo')
    b1 = stack('b1'); b2 = stack('b2')
    ln1_g = stack('ln1_g'); ln1_b = stack('ln1_b')
    ln2_g = stack('ln2_g'); ln2_b = stack('ln2_b')
    I = w1.shape[-1]

    tq = _pick_tile(T)

    def wspec(n2, n3):
        return pl.BlockSpec((None, n2, n3), lambda l, r: (l, 0, 0))

    out = pl.pallas_call(
        functools.partial(_layer_stack_kernel, num_heads=num_heads, tq=tq),
        out_shape=jax.ShapeDtypeStruct((B, T, H), jnp.float32),
        grid=(L, T // tq),
        in_specs=[
            pl.BlockSpec((B, T, H), lambda l, r: (0, 0, 0)),   # layer-0 input (resident)
            wspec(H, H), wspec(1, H),     # wq, bq
            wspec(H, H), wspec(1, H),     # wk, bk
            wspec(H, H), wspec(1, H),     # wv, bv
            wspec(H, H), wspec(1, H),     # wo, bo
            wspec(1, H), wspec(1, H),     # ln1 gamma/beta
            wspec(H, I), wspec(1, I),     # w1, b1
            wspec(I, H), wspec(1, H),     # w2, b2
            wspec(1, H), wspec(1, H),     # ln2 gamma/beta
        ],
        # Constant output index: the activation is carried across layers in the
        # resident output block and flushed to HBM once at the end.
        out_specs=pl.BlockSpec((B, T, H), lambda l, r: (0, 0, 0)),
        scratch_shapes=[
            pltpu.VMEM((B, T, H), jnp.bfloat16),   # per-layer K
            pltpu.VMEM((B, T, H), jnp.bfloat16),   # per-layer V
        ],
        # Both axes 'arbitrary': cross-layer / cross-tile carried state in
        # scratch prevents megacore sharding of this call.
        compiler_params=pltpu.CompilerParams(
            dimension_semantics=("arbitrary", "arbitrary"),
            vmem_limit_bytes=64 * 1024 * 1024),
    )(h, wq, bq, wk, bk, wv, bv, wo, bo, ln1_g, ln1_b,
      w1, b1, w2, b2, ln2_g, ln2_b)
    return out


# ---------------------------------------------------------------------------
# Pure-JAX reference (same math, XLA ops).  Matmul inputs are rounded through
# bf16 to mirror the kernel's MXU precision, so the check isolates kernel
# plumbing rather than the deliberate bf16 choice.
# ---------------------------------------------------------------------------
def _b16(x):
    return x.astype(jnp.bfloat16).astype(jnp.float32)


def wav2vec2_encoder_reference(x, params, *, num_heads):
    B, T, H = x.shape
    conv_w = params['conv_w']
    K, G, cin, _ = conv_w.shape
    pad = K // 2
    xpad = jnp.pad(x, ((0, 0), (pad, pad), (0, 0)))
    cw = _b16(conv_w)
    pos = jnp.zeros((B, T, H), jnp.float32)
    for k in range(K):
        xg = _b16(xpad[:, k:k + T, :]).reshape(B, T, G, cin)
        pos = pos + jnp.einsum('btgi,gio->btgo', xg, cw[k]).reshape(B, T, H)
    pos = _gelu(pos + params['conv_b'])
    h = _layer_norm(x + pos, params['ln_g'], params['ln_b'])

    d = H // num_heads
    scale = 1.0 / math.sqrt(d)
    for lp in params['layers']:
        q = _b16((jnp.einsum('bth,ho->bto', _b16(h), _b16(lp['wq'])) + lp['bq']) * scale)
        k_ = _b16(jnp.einsum('bth,ho->bto', _b16(h), _b16(lp['wk'])) + lp['bk'])
        v = _b16(jnp.einsum('bth,ho->bto', _b16(h), _b16(lp['wv'])) + lp['bv'])
        qh = q.reshape(B, T, num_heads, d)
        kh = k_.reshape(B, T, num_heads, d)
        vh = v.reshape(B, T, num_heads, d)
        s = jnp.einsum('bqnd,bknd->bnqk', qh, kh)
        p = jax.nn.softmax(s, axis=-1)
        ctx = _b16(jnp.einsum('bnqk,bknd->bqnd', _b16(p), vh).reshape(B, T, H))
        attn = jnp.einsum('bth,ho->bto', ctx, _b16(lp['wo'])) + lp['bo']
        h1 = _layer_norm(h + attn, lp['ln1_g'], lp['ln1_b'])
        ff = _gelu(jnp.einsum('bth,hi->bti', _b16(h1), _b16(lp['w1'])) + lp['b1'])
        ff = jnp.einsum('bti,ih->bth', _b16(ff), _b16(lp['w2'])) + lp['b2']
        h = _layer_norm(h1 + ff, lp['ln2_g'], lp['ln2_b'])
    return h


def init_params(key, *, hidden, intermediate, kernel_size, groups, num_layers):
    keys = iter(jax.random.split(key, 64))

    def nrm(shape, s=0.05):
        return jax.random.normal(next(keys), shape, jnp.float32) * s

    # Positional conv: Conv1d(H, H, K, groups=G, padding=K//2), weight_norm(dim=2).
    cin = hidden // groups
    v = nrm((hidden, cin, kernel_size), 0.2)          # weight_v  (H_out, H_in/G, K)
    g = 1.0 + nrm((1, 1, kernel_size), 0.1)           # weight_g  (1, 1, K)
    norm = jnp.sqrt(jnp.sum(v * v, axis=(0, 1), keepdims=True))
    w = g * v / norm                                  # effective weight (H_out, cin, K)
    # Grouped layout (K, G, cin_in, cout): conv_w[k, g, i, o] = w[g*cin + o, i, k]
    conv_w = jnp.transpose(w.reshape(groups, cin, cin, kernel_size), (3, 0, 2, 1))

    params = {
        'conv_w': conv_w,
        'conv_b': nrm((1, hidden), 0.02),
        'ln_g': 1.0 + nrm((1, hidden), 0.05),
        'ln_b': nrm((1, hidden), 0.02),
        'layers': [],
    }
    for _ in range(num_layers):
        lp = {
            'wq': nrm((hidden, hidden)), 'bq': nrm((1, hidden), 0.02),
            'wk': nrm((hidden, hidden)), 'bk': nrm((1, hidden), 0.02),
            'wv': nrm((hidden, hidden)), 'bv': nrm((1, hidden), 0.02),
            'wo': nrm((hidden, hidden)), 'bo': nrm((1, hidden), 0.02),
            'ln1_g': 1.0 + nrm((1, hidden), 0.05), 'ln1_b': nrm((1, hidden), 0.02),
            'w1': nrm((hidden, intermediate)), 'b1': nrm((1, intermediate), 0.02),
            'w2': nrm((intermediate, hidden)), 'b2': nrm((1, hidden), 0.02),
            'ln2_g': 1.0 + nrm((1, hidden), 0.05), 'ln2_b': nrm((1, hidden), 0.02),
        }
        params['layers'].append(lp)
    return params


if __name__ == "__main__":
    B, T, H = 2, 24, 32          # batch, sequence, hidden_size
    NUM_HEADS = 4                # num_attention_heads (head_dim = 8)
    INTERMEDIATE = 64            # intermediate_size
    KERNEL = 16                  # num_conv_pos_embeddings (even -> SamePad drops last frame)
    GROUPS = 4                   # num_conv_pos_embedding_groups
    NUM_LAYERS = 3               # num_hidden_layers

    root = jax.random.PRNGKey(0)
    kx, kp = jax.random.split(root)
    x = jax.random.normal(kx, (B, T, H), jnp.float32)
    params = init_params(kp, hidden=H, intermediate=INTERMEDIATE,
                         kernel_size=KERNEL, groups=GROUPS, num_layers=NUM_LAYERS)

    out = jax.block_until_ready(
        wav2vec2_encoder_forward(x, params, num_heads=NUM_HEADS))
    ref = jax.block_until_ready(
        wav2vec2_encoder_reference(x, params, num_heads=NUM_HEADS))

    assert out.shape == (B, T, H)
    assert bool(jnp.all(jnp.isfinite(out)))
    err = float(jnp.max(jnp.abs(out - ref)))
    assert bool(jnp.allclose(out, ref, rtol=2e-2, atol=2e-2)), err
    print("KERNEL_OK")
</pallas_src>

<mosaic_0001>
module attributes {stable_mosaic.version = 11 : i64} {
  func.func @_embed_kernel(%arg0: i32, %arg1: i32, %arg2: memref<1x16x32xbf16, #tpu.memory_space<vmem>>, %arg3: memref<16x32xf32, #tpu.memory_space<vmem>>, %arg4: memref<1x4x8x8xbf16, #tpu.memory_space<vmem>>, %arg5: memref<1x32xf32, #tpu.memory_space<vmem>>, %arg6: memref<1x32xf32, #tpu.memory_space<vmem>>, %arg7: memref<1x32xf32, #tpu.memory_space<vmem>>, %arg8: memref<16x32xf32, #tpu.memory_space<vmem>>, %arg9: memref<16x32xf32, #tpu.memory_space<vmem>>) attributes {dimension_semantics = [#tpu.dimension_semantics<parallel>, #tpu.dimension_semantics<arbitrary>], iteration_bounds = array<i64: 3, 16>, scalar_prefetch = 0 : i64, scratch_operands = 1 : i64, tpu.core_type = #tpu.core_type<tc>, window_params = [{transform_indices = @transform_0, window_bounds = array<i64: 1, 16, 32>}, {transform_indices = @transform_1, window_bounds = array<i64: 16, 32>}, {transform_indices = @transform_2, window_bounds = array<i64: 1, 4, 8, 8>}, {pipeline_mode = #tpu.pipeline_mode<synchronous>, transform_indices = @transform_3, window_bounds = array<i64: 1, 32>}, {pipeline_mode = #tpu.pipeline_mode<synchronous>, transform_indices = @transform_4, window_bounds = array<i64: 1, 32>}, {pipeline_mode = #tpu.pipeline_mode<synchronous>, transform_indices = @transform_5, window_bounds = array<i64: 1, 32>}, {transform_indices = @transform_6, window_bounds = array<i64: 16, 32>}]} {
    %c0_i32 = arith.constant 0 : i32
    %0 = arith.cmpi eq, %arg1, %c0_i32 : i32
    %1 = arith.extui %0 : i1 to i32
    %c0_i32_0 = arith.constant 0 : i32
    %2 = arith.cmpi ne, %1, %c0_i32_0 : i32
    scf.if %2 {
      %cst_15 = arith.constant 0.000000e+00 : f32
      %30 = vector.broadcast %cst_15 : f32 to vector<16x32xf32>
      %c0_16 = arith.constant 0 : index
      %c0_17 = arith.constant 0 : index
      %31 = vector.load %arg9[%c0_16, %c0_17] : memref<16x32xf32, #tpu.memory_space<vmem>>, vector<16x32xf32>
      tpu.vector_store %arg9[%c0_16, %c0_17], %30 {strides = array<i32>} : memref<16x32xf32, #tpu.memory_space<vmem>>, vector<16x32xf32>,
    } else {
    }
    %c0 = arith.constant 0 : index
    %c0_1 = arith.constant 0 : index
    %c0_2 = arith.constant 0 : index
    %3 = vector.load %arg2[%c0, %c0_1, %c0_2] : memref<1x16x32xbf16, #tpu.memory_space<vmem>>, vector<1x16x32xbf16>
    %4 = vector.shape_cast %3 : vector<1x16x32xbf16> to vector<16x32xbf16>
    %c0_3 = arith.constant 0 : index
    %c0_4 = arith.constant 0 : index
    %c0_5 = arith.constant 0 : index
    %c0_6 = arith.constant 0 : index
    %5 = vector.load %arg4[%c0_3, %c0_4, %c0_5, %c0_6] : memref<1x4x8x8xbf16, #tpu.memory_space<vmem>>, vector<1x4x8x8xbf16>
    %6 = vector.shape_cast %5 : vector<1x4x8x8xbf16> to vector<4x8x8xbf16>
    %7 = vector.extract_strided_slice %4 {offsets = [0, 0], sizes = [16, 8], strides = [1, 1]} : vector<16x32xbf16> to vector<16x8xbf16>
    %8 = vector.extract_strided_slice %6 {offsets = [0, 0, 0], sizes = [1, 8, 8], strides = [1, 1, 1]} : vector<4x8x8xbf16> to vector<1x8x8xbf16>
    %9 = vector.shape_cast %8 : vector<1x8x8xbf16> to vector<8x8xbf16>
    %cst = arith.constant dense<0.000000e+00> : vector<16x8xf32>
    %10 = tpu.matmul %7, %9, %cst {dimension_numbers = #tpu.dot_dimension_numbers<[1], [0], [0], [1], [0, 0, 1, 1], [], []>} : vector<16x8xbf16>, vector<8x8xbf16>, vector<16x8xf32> -> vector<16x8xf32>
    %11 = vector.extract_strided_slice %4 {offsets = [0, 8], sizes = [16, 8], strides = [1, 1]} : vector<16x32xbf16> to vector<16x8xbf16>
    %12 = vector.extract_strided_slice %6 {offsets = [1, 0, 0], sizes = [1, 8, 8], strides = [1, 1, 1]} : vector<4x8x8xbf16> to vector<1x8x8xbf16>
    %13 = vector.shape_cast %12 : vector<1x8x8xbf16> to vector<8x8xbf16>
    %cst_7 = arith.constant dense<0.000000e+00> : vector<16x8xf32>
    %14 = tpu.matmul %11, %13, %cst_7 {dimension_numbers = #tpu.dot_dimension_numbers<[1], [0], [0], [1], [0, 0, 1, 1], [], []>} : vector<16x8xbf16>, vector<8x8xbf16>, vector<16x8xf32> -> vector<16x8xf32>
    %15 = vector.extract_strided_slice %4 {offsets = [0, 16], sizes = [16, 8], strides = [1, 1]} : vector<16x32xbf16> to vector<16x8xbf16>
    %16 = vector.extract_strided_slice %6 {offsets = [2, 0, 0], sizes = [1, 8, 8], strides = [1, 1, 1]} : vector<4x8x8xbf16> to vector<1x8x8xbf16>
    %17 = vector.shape_cast %16 : vector<1x8x8xbf16> to vector<8x8xbf16>
    %cst_8 = arith.constant dense<0.000000e+00> : vector<16x8xf32>
    %18 = tpu.matmul %15, %17, %cst_8 {dimension_numbers = #tpu.dot_dimension_numbers<[1], [0], [0], [1], [0, 0, 1, 1], [], []>} : vector<16x8xbf16>, vector<8x8xbf16>, vector<16x8xf32> -> vector<16x8xf32>
    %19 = vector.extract_strided_slice %4 {offsets = [0, 24], sizes = [16, 8], strides = [1, 1]} : vector<16x32xbf16> to vector<16x8xbf16>
    %20 = vector.extract_strided_slice %6 {offsets = [3, 0, 0], sizes = [1, 8, 8], strides = [1, 1, 1]} : vector<4x8x8xbf16> to vector<1x8x8xbf16>
    %21 = vector.shape_cast %20 : vector<1x8x8xbf16> to vector<8x8xbf16>
    %cst_9 = arith.constant dense<0.000000e+00> : vector<16x8xf32>
    %22 = tpu.matmul %19, %21, %cst_9 {dimension_numbers = #tpu.dot_dimension_numbers<[1], [0], [0], [1], [0, 0, 1, 1], [], []>} : vector<16x8xbf16>, vector<8x8xbf16>, vector<16x8xf32> -> vector<16x8xf32>
    %c0_10 = arith.constant 0 : index
    %c0_11 = arith.constant 0 : index
    %23 = vector.load %arg9[%c0_10, %c0_11] : memref<16x32xf32, #tpu.memory_space<vmem>>, vector<16x32xf32>
    %24 = tpu.concatenate %10, %14, %18, %22 in 1 : vector<16x8xf32>, vector<16x8xf32>, vector<16x8xf32>, vector<16x8xf32> -> vector<16x32xf32>
    %25 = arith.addf %23, %24 : vector<16x32xf32>
    %c0_12 = arith.constant 0 : index
    %c0_13 = arith.constant 0 : index
    %26 = vector.load %arg9[%c0_12, %c0_13] : memref<16x32xf32, #tpu.memory_space<vmem>>, vector<16x32xf32>
    tpu.vector_store %arg9[%c0_12, %c0_13], %25 {strides = array<i32>} : memref<16x32xf32, #tpu.memory_space<vmem>>, vector<16x32xf32>,
    %c15_i32 = arith.constant 15 : i32
    %27 = arith.cmpi eq, %arg1, %c15_i32 : i32
    %28 = arith.extui %27 : i1 to i32
    %c0_i32_14 = arith.constant 0 : i32
    %29 = arith.cmpi ne, %28, %c0_i32_14 : i32
    scf.if %29 {
      %c0_15 = arith.constant 0 : index
      %c0_16 = arith.constant 0 : index
      %30 = vector.load %arg9[%c0_15, %c0_16] : memref<16x32xf32, #tpu.memory_space<vmem>>, vector<16x32xf32>
      %c0_17 = arith.constant 0 : index
      %c0_18 = arith.constant 0 : index
      %31 = vector.load %arg5[%c0_17, %c0_18] : memref<1x32xf32, #tpu.memory_space<vmem>>, vector<1x32xf32>
      %32 = vector.broadcast %31 : vector<1x32xf32> to vector<16x32xf32>
      %33 = arith.addf %30, %32 : vector<16x32xf32>
      %cst_19 = arith.constant 5.000000e-01 : f32
      %34 = vector.broadcast %cst_19 : f32 to vector<16x32xf32>
      %35 = arith.mulf %34, %33 : vector<16x32xf32>
      %cst_20 = arith.constant 4.471500e-02 : f32
      %36 = vector.broadcast %cst_20 : f32 to vector<16x32xf32>
      %37 = arith.mulf %36, %33 : vector<16x32xf32>
      %38 = arith.mulf %37, %33 : vector<16x32xf32>
      %39 = arith.mulf %38, %33 : vector<16x32xf32>
      %40 = arith.addf %33, %39 : vector<16x32xf32>
      %cst_21 = arith.constant 0.797884583 : f32
      %41 = vector.broadcast %cst_21 : f32 to vector<16x32xf32>
      %42 = arith.mulf %41, %40 : vector<16x32xf32>
      %43 = math.tanh %42 : vector<16x32xf32>
      %cst_22 = arith.constant 1.000000e+00 : f32
      %44 = vector.broadcast %cst_22 : f32 to vector<16x32xf32>
      %45 = arith.addf %44, %43 : vector<16x32xf32>
      %46 = arith.mulf %35, %45 : vector<16x32xf32>
      %c0_23 = arith.constant 0 : index
      %c0_24 = arith.constant 0 : index
      %47 = vector.load %arg3[%c0_23, %c0_24] : memref<16x32xf32, #tpu.memory_space<vmem>>, vector<16x32xf32>
      %48 = arith.addf %47, %46 : vector<16x32xf32>
      %c0_25 = arith.constant 0 : index
      %c0_26 = arith.constant 0 : index
      %49 = vector.load %arg6[%c0_25, %c0_26] : memref<1x32xf32, #tpu.memory_space<vmem>>, vector<1x32xf32>
      %c0_27 = arith.constant 0 : index
      %c0_28 = arith.constant 0 : index
      %50 = vector.load %arg7[%c0_27, %c0_28] : memref<1x32xf32, #tpu.memory_space<vmem>>, vector<1x32xf32>
      %cst_29 = arith.constant dense<0.000000e+00> : vector<16xf32>
      %51 = vector.multi_reduction <add>, %48, %cst_29 [1] : vector<16x32xf32> to vector<16xf32>
      %52 = vector.shape_cast %51 : vector<16xf32> to vector<16x1xf32>
      %cst_30 = arith.constant 3.200000e+01 : f32
      %53 = vector.broadcast %cst_30 : f32 to vector<16x1xf32>
      %54 = arith.divf %52, %53 : vector<16x1xf32>
      %55 = vector.broadcast %54 : vector<16x1xf32> to vector<16x32xf32>
      %56 = arith.subf %48, %55 : vector<16x32xf32>
      %57 = arith.mulf %56, %56 : vector<16x32xf32>
      %cst_31 = arith.constant dense<0.000000e+00> : vector<16xf32>
      %58 = vector.multi_reduction <add>, %57, %cst_31 [1] : vector<16x32xf32> to vector<16xf32>
      %59 = vector.shape_cast %58 : vector<16xf32> to vector<16x1xf32>
      %cst_32 = arith.constant 3.200000e+01 : f32
      %60 = vector.broadcast %cst_32 : f32 to vector<16x1xf32>
      %61 = arith.divf %59, %60 : vector<16x1xf32>
      %cst_33 = arith.constant 9.99999974E-6 : f32
      %62 = vector.broadcast %cst_33 : f32 to vector<16x1xf32>
      %63 = arith.addf %61, %62 : vector<16x1xf32>
      %64 = math.rsqrt %63 : vector<16x1xf32>
      %65 = vector.broadcast %64 : vector<16x1xf32> to vector<16x32xf32>
      %66 = arith.mulf %56, %65 : vector<16x32xf32>
      %67 = vector.broadcast %49 : vector<1x32xf32> to vector<16x32xf32>
      %68 = arith.mulf %66, %67 : vector<16x32xf32>
      %69 = vector.broadcast %50 : vector<1x32xf32> to vector<16x32xf32>
      %70 = arith.addf %68, %69 : vector<16x32xf32>
      %c0_34 = arith.constant 0 : index
      %c0_35 = arith.constant 0 : index
      %71 = vector.load %arg8[%c0_34, %c0_35] : memref<16x32xf32, #tpu.memory_space<vmem>>, vector<16x32xf32>
      tpu.vector_store %arg8[%c0_34, %c0_35], %70 {strides = array<i32>} : memref<16x32xf32, #tpu.memory_space<vmem>>, vector<16x32xf32>,
    } else {
    }
    return
  }
  func.func @transform_0(%arg0: i32, %arg1: i32) -> (i32, i32, i32) {
    %c0_i32 = arith.constant 0 : i32
    %c0_i32_0 = arith.constant 0 : i32
    return %arg1, %arg0, %c0_i32 : i32, i32, i32
  }
  func.func @transform_1(%arg0: i32, %arg1: i32) -> (i32, i32) {
    %c0_i32 = arith.constant 0 : i32
    %c0_i32_0 = arith.constant 0 : i32
    return %arg0, %c0_i32 : i32, i32
  }
  func.func @transform_2(%arg0: i32, %arg1: i32) -> (i32, i32, i32, i32) {
    %c0_i32 = arith.constant 0 : i32
    %c0_i32_0 = arith.constant 0 : i32
    %c0_i32_1 = arith.constant 0 : i32
    %c0_i32_2 = arith.constant 0 : i32
    return %arg1, %c0_i32, %c0_i32_0, %c0_i32_1 : i32, i32, i32, i32
  }
  func.func @transform_3(%arg0: i32, %arg1: i32) -> (i32, i32) {
    %c0_i32 = arith.constant 0 : i32
    %c0_i32_0 = arith.constant 0 : i32
    %c0_i32_1 = arith.constant 0 : i32
    return %c0_i32, %c0_i32_0 : i32, i32
  }
  func.func @transform_4(%arg0: i32, %arg1: i32) -> (i32, i32) {
    %c0_i32 = arith.constant 0 : i32
    %c0_i32_0 = arith.constant 0 : i32
    %c0_i32_1 = arith.constant 0 : i32
    return %c0_i32, %c0_i32_0 : i32, i32
  }
  func.func @transform_5(%arg0: i32, %arg1: i32) -> (i32, i32) {
    %c0_i32 = arith.constant 0 : i32
    %c0_i32_0 = arith.constant 0 : i32
    %c0_i32_1 = arith.constant 0 : i32
    return %c0_i32, %c0_i32_0 : i32, i32
  }
  func.func @transform_6(%arg0: i32, %arg1: i32) -> (i32, i32) {
    %c0_i32 = arith.constant 0 : i32
    %c0_i32_0 = arith.constant 0 : i32
    return %arg0, %c0_i32 : i32, i32
  }
}

</mosaic_0001>

<llo_original>
// kernel: tpu_custom_call.1
$region0: #{tpu_custom_call.1}
  #allocation0 [shape = 'u32[]', space=smem, size = 0x4, offset = 0x4, fixed_abs, tag = 'smem constant byte address 0x4 - core index']
  #allocation1 [shape = 'u32[144,128]{1,0:T(1,128)}', space=vmem, size = 0x12000, scoped, tag = 'internal scratch']
  #allocation2 [shape = 'f32[16,32]{1,0:T(8,128)}', space=vmem, size = 0x2000, scoped, tag = 'scratch operand']
  %s0 = inlined_call_operand.hbm [shape: bf16[16,48,32], index: 0, kind: input, shape index: {}]
  %s1 = inlined_call_operand.hbm [shape: f32[48,32], index: 1, kind: input, shape index: {}]
  %s2 = inlined_call_operand.hbm [shape: bf16[16,4,8,8], index: 2, kind: input, shape index: {}]
  %s3 = inlined_call_operand.hbm [shape: f32[1,32], index: 3, kind: input, shape index: {}]
  %s4 = inlined_call_operand.hbm [shape: f32[1,32], index: 4, kind: input, shape index: {}]
  %s5 = inlined_call_operand.hbm [shape: f32[1,32], index: 5, kind: input, shape index: {}]
  %s6 = inlined_call_operand.hbm [shape: f32[48,32], index: 6, kind: output, shape index: {}]
  %s7 = sld [smem:[#allocation0]]
  $region89: #{tpu_custom_call.1} parent=0
    _
  %s9 = ssub.s32 1, %s7
  %s10 = scalar_select 0, %s9, %s7
  $region1: #{tpu_custom_call.1} parent=0
    #allocation3 [shape = 'u8[8192]{0}', space=vmem, size = 0x2000, scoped, tag = 'input window, operand 0']
    #allocation4 [shape = 's32[2]{0}', space=sflag, size = 0x8, scoped, tag = 'scoped memory for tpu_custom_call.1']
    #allocation5 [shape = 's32[2]{0}', space=sflag, size = 0x8, scoped, tag = 'scoped memory for tpu_custom_call.1']
    #allocation6 [shape = 'u8[16384]{0}', space=vmem, size = 0x4000, scoped, tag = 'input window, operand 1']
    #allocation7 [shape = 's32[2]{0}', space=sflag, size = 0x8, scoped, tag = 'scoped memory for tpu_custom_call.1']
    #allocation8 [shape = 'u8[16384]{0}', space=vmem, size = 0x4000, scoped, tag = 'input window, operand 2']
    #allocation9 [shape = 'u8[512]{0}', space=vmem, size = 0x400, scoped, tag = 'input window, operand 3, single buffered']
    #allocation10 [shape = 's32[1]{0}', space=sflag, size = 0x4, scoped, tag = 'scoped memory for tpu_custom_call.1']
    #allocation11 [shape = 'u8[512]{0}', space=vmem, size = 0x400, scoped, tag = 'input window, operand 4, single buffered']
    #allocation12 [shape = 'u8[512]{0}', space=vmem, size = 0x400, scoped, tag = 'input window, operand 5, single buffered']
    #allocation13 [shape = 's32[1]{0}', space=sflag, size = 0x4, scoped, tag = 'scoped memory for tpu_custom_call.1']
    #allocation14 [shape = 'u8[16384]{0}', space=vmem, size = 0x4000, scoped, tag = 'output window, operand 0']
    %11 = vsyncpa [#allocation4], 0
    %s12 = scalar_lea.sflag [#allocation4], 1
    %13 = vsyncpa %s12, 0
    %14 = vsyncpa [#allocation7], 0
    %s15 = scalar_lea.sflag [#allocation7], 1
    %16 = vsyncpa %s15, 0
    %17 = vsyncpa [#allocation10], 0
    %18 = vsyncpa [#allocation13], 0
    %19 = vsyncpa [#allocation5], 0
    %s20 = scalar_lea.sflag [#allocation5], 1
    %21 = vsyncpa %s20, 0
    loop: start=0, step=1, limit=50
    $region2: #{tpu_custom_call.1} parent=1 // loop_pre_header
      _
    $region3: #{tpu_custom_call.1} parent=1 // loop_header
      %s23 = sphi 0, %s27
      %p24 = scmp.ge.s32.totalorder %s23, 50
      %s30 = sphi 0, %s42
      %s31 = sphi 0, %s38
      %s32 = sphi 0, %s30
      %s33 = sphi 0, %s31
      %s34 = sphi 0, %s32
      %s35 = sphi 0, %s33
      %s47 = sphi 0, %s49
      %s50 = sphi 0, %s47
      %s51 = sphi 0, %s50
      %s67 = sphi 0, %s51
      %s73 = sphi 0, %s75
      %s76 = sphi 0, %s73
      %s77 = sphi 0, %s76
      %s93 = sphi 0, %s77
      %s99 = sphi 0, %s101
      %s102 = sphi 0, %s99
      %s103 = sphi 0, %s102
      %s119 = sphi 0, %s103
      %s123 = sphi 0, %s123
      %s125 = sphi 0, %s123
      %s126 = sphi 0, %s125
      %s140 = sphi 0, %s126
      %s144 = sphi 0, %s144
      %s146 = sphi 0, %s144
      %s147 = sphi 0, %s146
      %s161 = sphi 0, %s147
      %s165 = sphi 0, %s165
      %s167 = sphi 0, %s165
      %s168 = sphi 0, %s167
      %s182 = sphi 0, %s168
      %s188 = sphi 0, %s190
      %s191 = sphi 0, %s188
      %s192 = sphi 0, %s191
      %s208 = sphi 0, %s192
    $region4: #{tpu_custom_call.1} parent=1 // loop_header_branch
      %26 = sbr.rel (%p24) target = $region8
    $region5: #{tpu_custom_call.1} parent=1 // loop_body
      %s28 = ssub.s32 %s23, 1
      %s29 = ssub.s32 %s23, 2
      %s36 = sadd.s32 1, %s31
      %p37 = scmp.ge.s32.totalorder %s36, 16
      %s38 = scalar_select %p37, 0, %s36
      %s39 = sadd.s32 1, %s30
      %s40 = scalar_select %p37, %s39, %s30
      %p41 = scmp.ge.s32.totalorder %s40, 3
      %s42 = scalar_select %p41, 0, %s40
      %s43 = ssub.s32 %s31, %s38
      %s44 = ssub.s32 %s30, %s42
      %s45 = sor.u32 %s43, %s44
      %p46 = scmp.eq.s32.totalorder %s45, 0
      %s48 = sadd.s32 %s47, 1
      %s49 = scalar_select %p46, %s47, %s48
      %p52 = pneg %p46
      %p53 = scmp.eq.s32.totalorder %s23, 47
      %p54 = por %p52, %p53
      %p55 = scmp.ne.s32.totalorder %s47, %s50
      %p56 = scmp.eq.s32.totalorder %s23, 0
      %p57 = por %p55, %p56
      %p58 = scmp.ne.s32.totalorder %s47, %s50
      %p59 = scmp.eq.s32.totalorder %s28, 47
      %p60 = por %p58, %p59
      %p61 = scmp.ne.s32.totalorder %s50, %s51
      %p62 = scmp.eq.s32.totalorder %s28, 0
      %p63 = por %p61, %p62
      %p64 = scmp.ne.s32.totalorder %s50, %s51
      %p65 = scmp.eq.s32.totalorder %s29, 47
      %p66 = por %p64, %p65
      %p68 = scmp.ne.s32.totalorder %s51, %s67
      %p69 = scmp.eq.s32.totalorder %s29, 0
      %p70 = por %p68, %p69
      %s71 = ssub.s32 %s30, %s42
      %p72 = scmp.eq.s32.totalorder %s71, 0
      %s74 = sadd.s32 %s73, 1
      %s75 = scalar_select %p72, %s73, %s74
      %p78 = pneg %p72
      %p79 = scmp.eq.s32.totalorder %s23, 47
      %p80 = por %p78, %p79
      %p81 = scmp.ne.s32.totalorder %s73, %s76
      %p82 = scmp.eq.s32.totalorder %s23, 0
      %p83 = por %p81, %p82
      %p84 = scmp.ne.s32.totalorder %s73, %s76
      %p85 = scmp.eq.s32.totalorder %s28, 47
      %p86 = por %p84, %p85
      %p87 = scmp.ne.s32.totalorder %s76, %s77
      %p88 = scmp.eq.s32.totalorder %s28, 0
      %p89 = por %p87, %p88
      %p90 = scmp.ne.s32.totalorder %s76, %s77
      %p91 = scmp.eq.s32.totalorder %s29, 47
      %p92 = por %p90, %p91
      %p94 = scmp.ne.s32.totalorder %s77, %s93
      %p95 = scmp.eq.s32.totalorder %s29, 0
      %p96 = por %p94, %p95
      %s97 = ssub.s32 %s31, %s38
      %p98 = scmp.eq.s32.totalorder %s97, 0
      %s100 = sadd.s32 %s99, 1
      %s101 = scalar_select %p98, %s99, %s100
      %p104 = pneg %p98
      %p105 = scmp.eq.s32.totalorder %s23, 47
      %p106 = por %p104, %p105
      %p107 = scmp.ne.s32.totalorder %s99, %s102
      %p108 = scmp.eq.s32.totalorder %s23, 0
      %p109 = por %p107, %p108
      %p110 = scmp.ne.s32.totalorder %s99, %s102
      %p111 = scmp.eq.s32.totalorder %s28, 47
      %p112 = por %p110, %p111
      %p113 = scmp.ne.s32.totalorder %s102, %s103
      %p114 = scmp.eq.s32.totalorder %s28, 0
      %p115 = por %p113, %p114
      %p116 = scmp.ne.s32.totalorder %s102, %s103
      %p117 = scmp.eq.s32.totalorder %s29, 47
      %p118 = por %p116, %p117
      %p120 = scmp.ne.s32.totalorder %s103, %s119
      %p121 = scmp.eq.s32.totalorder %s29, 0
      %p122 = por %p120, %p121
      %s124 = sadd.s32 %s123, 1
      %p127 = scmp.eq.s32.totalorder %s23, 47
      %p128 = scmp.ne.s32.totalorder %s123, %s125
      %p129 = scmp.eq.s32.totalorder %s23, 0
      %p130 = por %p128, %p129
      %p131 = scmp.ne.s32.totalorder %s123, %s125
      %p132 = scmp.eq.s32.totalorder %s28, 47
      %p133 = por %p131, %p132
      %p134 = scmp.ne.s32.totalorder %s125, %s126
      %p135 = scmp.eq.s32.totalorder %s28, 0
      %p136 = por %p134, %p135
      %p137 = scmp.ne.s32.totalorder %s125, %s126
      %p138 = scmp.eq.s32.totalorder %s29, 47
      %p139 = por %p137, %p138
      %p141 = scmp.ne.s32.totalorder %s126, %s140
      %p142 = scmp.eq.s32.totalorder %s29, 0
      %p143 = por %p141, %p142
      %s145 = sadd.s32 %s144, 1
      %p148 = scmp.eq.s32.totalorder %s23, 47
      %p149 = scmp.ne.s32.totalorder %s144, %s146
      %p150 = scmp.eq.s32.totalorder %s23, 0
      %p151 = por %p149, %p150
      %p152 = scmp.ne.s32.totalorder %s144, %s146
      %p153 = scmp.eq.s32.totalorder %s28, 47
      %p154 = por %p152, %p153
      %p155 = scmp.ne.s32.totalorder %s146, %s147
      %p156 = scmp.eq.s32.totalorder %s28, 0
      %p157 = por %p155, %p156
      %p158 = scmp.ne.s32.totalorder %s146, %s147
      %p159 = scmp.eq.s32.totalorder %s29, 47
      %p160 = por %p158, %p159
      %p162 = scmp.ne.s32.totalorder %s147, %s161
      %p163 = scmp.eq.s32.totalorder %s29, 0
      %p164 = por %p162, %p163
      %s166 = sadd.s32 %s165, 1
      %p169 = scmp.eq.s32.totalorder %s23, 47
      %p170 = scmp.ne.s32.totalorder %s165, %s167
      %p171 = scmp.eq.s32.totalorder %s23, 0
      %p172 = por %p170, %p171
      %p173 = scmp.ne.s32.totalorder %s165, %s167
      %p174 = scmp.eq.s32.totalorder %s28, 47
      %p175 = por %p173, %p174
      %p176 = scmp.ne.s32.totalorder %s167, %s168
      %p177 = scmp.eq.s32.totalorder %s28, 0
      %p178 = por %p176, %p177
      %p179 = scmp.ne.s32.totalorder %s167, %s168
      %p180 = scmp.eq.s32.totalorder %s29, 47
      %p181 = por %p179, %p180
      %p183 = scmp.ne.s32.totalorder %s168, %s182
      %p184 = scmp.eq.s32.totalorder %s29, 0
      %p185 = por %p183, %p184
      %s186 = ssub.s32 %s30, %s42
      %p187 = scmp.eq.s32.totalorder %s186, 0
      %s189 = sadd.s32 %s188, 1
      %s190 = scalar_select %p187, %s188, %s189
      %p193 = pneg %p187
      %p194 = scmp.eq.s32.totalorder %s23, 47
      %p195 = por %p193, %p194
      %p196 = scmp.ne.s32.totalorder %s188, %s191
      %p197 = scmp.eq.s32.totalorder %s23, 0
      %p198 = por %p196, %p197
      %p199 = scmp.ne.s32.totalorder %s188, %s191
      %p200 = scmp.eq.s32.totalorder %s28, 47
      %p201 = por %p199, %p200
      %p202 = scmp.ne.s32.totalorder %s191, %s192
      %p203 = scmp.eq.s32.totalorder %s28, 0
      %p204 = por %p202, %p203
      %p205 = scmp.ne.s32.totalorder %s191, %s192
      %p206 = scmp.eq.s32.totalorder %s29, 47
      %p207 = por %p205, %p206
      %p209 = scmp.ne.s32.totalorder %s192, %s208
      %p210 = scmp.eq.s32.totalorder %s29, 0
      %p211 = por %p209, %p210
      %p212 = scmp.le.s32.totalorder 1, %s23
      %p213 = scmp.lt.s32.totalorder %s23, 49
      %p214 = pnand %p212, %p213
      %p215 = pneg %p214
      // Predicated region
      $region9: #{tpu_custom_call.1} parent=5 // pred_check
        _
      $region10: #{tpu_custom_call.1} parent=5 // pred_check_branch
        %217 = sbr.rel (%p214) target = $region12
      $region11: #{tpu_custom_call.1} parent=5 // pred_region
        %s218 = ssub.s32 %s23, 1
        // Predicated region
        $region13: #{tpu_custom_call.1} parent=11 // pred_check
          %p219 = pneg %p136
        $region14: #{tpu_custom_call.1} parent=11 // pred_check_branch
          %221 = sbr.rel (%p219) target = $region16
        $region15: #{tpu_custom_call.1} parent=11 // pred_region
          %s223 = ssub.s32 16, 16
          %224 = vsyncadd [#allocation10], %s223
          %s226 = sshll.u32 [#allocation9], 4
          %s227 = int_to_ptr.vmem [resolvable:$true] %s226
          %229 = dma.hbm_to_vmem [thread:$0]  %s3, 16, %s227, [#allocation10]
        $region16: #{tpu_custom_call.1} parent=11 // pred_fallthru
          _
        // Predicated region
        $region17: #{tpu_custom_call.1} parent=11 // pred_check
          %p230 = pneg %p157
        $region18: #{tpu_custom_call.1} parent=11 // pred_check_branch
          %232 = sbr.rel (%p230) target = $region20
        $region19: #{tpu_custom_call.1} parent=11 // pred_region
          %s234 = ssub.s32 16, 16
          %235 = vsyncadd [#allocation10], %s234
          %s237 = sshll.u32 [#allocation11], 4
          %s238 = int_to_ptr.vmem [resolvable:$true] %s237
          %240 = dma.hbm_to_vmem [thread:$0]  %s4, 16, %s238, [#allocation10]
        $region20: #{tpu_custom_call.1} parent=11 // pred_fallthru
          _
        // Predicated region
        $region21: #{tpu_custom_call.1} parent=11 // pred_check
          %p241 = pneg %p178
        $region22: #{tpu_custom_call.1} parent=11 // pred_check_branch
          %243 = sbr.rel (%p241) target = $region24
        $region23: #{tpu_custom_call.1} parent=11 // pred_region
          %s245 = ssub.s32 16, 16
          %246 = vsyncadd [#allocation13], %s245
          %s248 = sshll.u32 [#allocation12], 4
          %s249 = int_to_ptr.vmem [resolvable:$true] %s248
          %251 = dma.hbm_to_vmem [thread:$0]  %s5, 16, %s249, [#allocation13]
        $region24: #{tpu_custom_call.1} parent=11 // pred_fallthru
          _
      $region12: #{tpu_custom_call.1} parent=5 // pred_fallthru
        _
      %p252 = scmp.lt.s32.totalorder %s23, 48
      // Predicated region
      $region25: #{tpu_custom_call.1} parent=5 // pred_check
        %p253 = pneg %p252
      $region26: #{tpu_custom_call.1} parent=5 // pred_check_branch
        %255 = sbr.rel (%p253) target = $region28
      $region27: #{tpu_custom_call.1} parent=5 // pred_region
        // Predicated region
        $region29: #{tpu_custom_call.1} parent=27 // pred_check
          %p256 = pneg %p57
        $region30: #{tpu_custom_call.1} parent=27 // pred_check_branch
          %258 = sbr.rel (%p256) target = $region32
        $region31: #{tpu_custom_call.1} parent=27 // pred_region
          %s259 = sand.u32 %s47, 1
          %s260 = scalar_lea.sflag [#allocation4], %s259
          %s261 = sand.u32 %s47, 1
          %s262 = smul.addr %s261, 8
          %s263 = scalar_lea.vmem [#allocation3], %s262
          %s264 = smul.u32 2, %s30
          %s266 = ssub.s32 128, 128
          %267 = vsyncadd %s260, %s266
          %s268 = smul.addr %s31, 6
          %s269 = sadd.s32 %s264, %s268
          %s270 = smul.addr %s269, 64
          %s271 = scalar_lea.hbm %s0, %s270
          %s272 = sshll.u32 %s263, 4
          %s273 = int_to_ptr.vmem [resolvable:$true] %s272
          %278 = dma.hbm_to_vmem [thread:$0]  %s271, 128, %s273, %s260, 64, 64, 4
        $region32: #{tpu_custom_call.1} parent=27 // pred_fallthru
          _
        // Predicated region
        $region33: #{tpu_custom_call.1} parent=27 // pred_check
          %p279 = pneg %p83
        $region34: #{tpu_custom_call.1} parent=27 // pred_check_branch
          %281 = sbr.rel (%p279) target = $region36
        $region35: #{tpu_custom_call.1} parent=27 // pred_region
          %s282 = sand.u32 %s23, 1
          %s283 = scalar_lea.sflag [#allocation7], %s282
          %s284 = sand.u32 %s73, 1
          %s285 = smul.addr %s284, 16
          %s286 = scalar_lea.vmem [#allocation6], %s285
          %s287 = smul.u32 2, %s30
          %s289 = ssub.s32 256, 256
          %290 = vsyncadd %s283, %s289
          %s291 = smul.addr %s287, 128
          %s292 = scalar_lea.hbm %s1, %s291
          %s293 = sshll.u32 %s286, 4
          %s294 = int_to_ptr.vmem [resolvable:$true] %s293
          %299 = dma.hbm_to_vmem [thread:$0]  %s292, 256, %s294, %s283, 128, 128, 8
        $region36: #{tpu_custom_call.1} parent=27 // pred_fallthru
          _
        // Predicated region
        $region37: #{tpu_custom_call.1} parent=27 // pred_check
          %p300 = pneg %p109
        $region38: #{tpu_custom_call.1} parent=27 // pred_check_branch
          %302 = sbr.rel (%p300) target = $region40
        $region39: #{tpu_custom_call.1} parent=27 // pred_region
          %s303 = sand.u32 %s23, 1
          %s304 = scalar_lea.sflag [#allocation7], %s303
          %s305 = sand.u32 %s99, 1
          %s306 = smul.addr %s305, 16
          %s307 = scalar_lea.vmem [#allocation8], %s306
          %s309 = ssub.s32 256, 256
          %310 = vsyncadd %s304, %s309
          %s311 = smul.addr %s31, 4
          %s312 = smul.addr %s311, 64
          %s313 = scalar_lea.hbm %s2, %s312
          %s314 = sshll.u32 %s307, 4
          %s315 = int_to_ptr.vmem [resolvable:$true] %s314
          %320 = dma.hbm_to_vmem [thread:$0]  %s313, 256, %s315, %s304, 64, 64, 4
        $region40: #{tpu_custom_call.1} parent=27 // pred_fallthru
          _
      $region28: #{tpu_custom_call.1} parent=5 // pred_fallthru
        _
      %p321 = scmp.le.s32.totalorder 1, %s23
      %p322 = scmp.lt.s32.totalorder %s23, 49
      %p323 = pnand %p321, %p322
      %p324 = pneg %p323
      // Predicated region
      $region41: #{tpu_custom_call.1} parent=5 // pred_check
        _
      $region42: #{tpu_custom_call.1} parent=5 // pred_check_branch
        %326 = sbr.rel (%p323) target = $region44
      $region43: #{tpu_custom_call.1} parent=5 // pred_region
        %s327 = ssub.s32 %s23, 1
        %s328 = sand.u32 %s50, 1
        %s329 = scalar_lea.sflag [#allocation4], %s328
        %s330 = sand.u32 %s50, 1
        %s331 = smul.addr %s330, 8
        %s332 = scalar_lea.vmem [#allocation3], %s331
        // Predicated region
        $region45: #{tpu_custom_call.1} parent=43 // pred_check
          %p333 = pneg %p63
        $region46: #{tpu_custom_call.1} parent=43 // pred_check_branch
          %335 = sbr.rel (%p333) target = $region48
        $region47: #{tpu_custom_call.1} parent=43 // pred_region
          %336 = dma.done %s329, 128
        $region48: #{tpu_custom_call.1} parent=43 // pred_fallthru
          _
        %s337 = sand.u32 %s28, 1
        %s338 = scalar_lea.sflag [#allocation7], %s337
        %s339 = sand.u32 %s76, 1
        %s340 = smul.addr %s339, 16
        %s341 = scalar_lea.vmem [#allocation6], %s340
        // Predicated region
        $region49: #{tpu_custom_call.1} parent=43 // pred_check
          %p342 = pneg %p89
        $region50: #{tpu_custom_call.1} parent=43 // pred_check_branch
          %344 = sbr.rel (%p342) target = $region52
        $region51: #{tpu_custom_call.1} parent=43 // pred_region
          %345 = dma.done %s338, 256
        $region52: #{tpu_custom_call.1} parent=43 // pred_fallthru
          _
        %s346 = sand.u32 %s28, 1
        %s347 = scalar_lea.sflag [#allocation7], %s346
        %s348 = sand.u32 %s102, 1
        %s349 = smul.addr %s348, 16
        %s350 = scalar_lea.vmem [#allocation8], %s349
        // Predicated region
        $region53: #{tpu_custom_call.1} parent=43 // pred_check
          %p351 = pneg %p115
        $region54: #{tpu_custom_call.1} parent=43 // pred_check_branch
          %353 = sbr.rel (%p351) target = $region56
        $region55: #{tpu_custom_call.1} parent=43 // pred_region
          %354 = dma.done %s347, 256
        $region56: #{tpu_custom_call.1} parent=43 // pred_fallthru
          _
        // Predicated region
        $region57: #{tpu_custom_call.1} parent=43 // pred_check
          %p355 = pneg %p136
        $region58: #{tpu_custom_call.1} parent=43 // pred_check_branch
          %357 = sbr.rel (%p355) target = $region60
        $region59: #{tpu_custom_call.1} parent=43 // pred_region
          %358 = dma.done [#allocation10], 16
        $region60: #{tpu_custom_call.1} parent=43 // pred_fallthru
          _
        // Predicated region
        $region61: #{tpu_custom_call.1} parent=43 // pred_check
          %p359 = pneg %p157
        $region62: #{tpu_custom_call.1} parent=43 // pred_check_branch
          %361 = sbr.rel (%p359) target = $region64
        $region63: #{tpu_custom_call.1} parent=43 // pred_region
          %362 = dma.done [#allocation10], 16
        $region64: #{tpu_custom_call.1} parent=43 // pred_fallthru
          _
        // Predicated region
        $region65: #{tpu_custom_call.1} parent=43 // pred_check
          %p363 = pneg %p178
        $region66: #{tpu_custom_call.1} parent=43 // pred_check_branch
          %365 = sbr.rel (%p363) target = $region68
        $region67: #{tpu_custom_call.1} parent=43 // pred_region
          %366 = dma.done [#allocation13], 16
        $region68: #{tpu_custom_call.1} parent=43 // pred_fallthru
          _
        %s367 = sand.u32 %s50, 1
        %s368 = scalar_lea.sflag [#allocation4], %s367
        %s369 = sand.u32 %s50, 1
        %s370 = smul.addr %s369, 8
        %s371 = scalar_lea.vmem [#allocation3], %s370
        %p372 = pneg %p63
        %p373 = pneg %p60
        %s374 = sand.u32 %s28, 1
        %s375 = scalar_lea.sflag [#allocation7], %s374
        %s376 = sand.u32 %s76, 1
        %s377 = smul.addr %s376, 16
        %s378 = scalar_lea.vmem [#allocation6], %s377
        %p379 = pneg %p89
        %p380 = pneg %p86
        %s381 = sand.u32 %s28, 1
        %s382 = scalar_lea.sflag [#allocation7], %s381
        %s383 = sand.u32 %s102, 1
        %s384 = smul.addr %s383, 16
        %s385 = scalar_lea.vmem [#allocation8], %s384
        %p386 = pneg %p115
        %p387 = pneg %p112
        %p388 = pneg %p136
        %p389 = pneg %p133
        %p390 = pneg %p157
        %p391 = pneg %p154
        %p392 = pneg %p178
        %p393 = pneg %p175
        %p394 = pneg %p204
        %p395 = pneg %p201
        %s396 = sand.u32 %s191, 1
        %s397 = scalar_lea.sflag [#allocation5], %s396
        %s398 = sand.u32 %s191, 1
        %s399 = smul.addr %s398, 16
        %s400 = scalar_lea.vmem [#allocation14], %s399
        %s401 = smul.u32 2, %s32
        %s402 = smul.u32 2, %s32
        %s403 = smul.u32 2, %s32
        %p405 = scmp.eq.s32.totalorder %s33, 0
        // Predicated region
        $region69: #{tpu_custom_call.1} parent=43 // pred_check
          %p406 = pneg %p405
        $region70: #{tpu_custom_call.1} parent=43 // pred_check_branch
          %408 = sbr.rel (%p406) target = $region72
        $region71: #{tpu_custom_call.1} parent=43 // pred_region
          %vm409 = vcmask 261120
          %410 = vst.msk [vmem:[#allocation2] sm:$0xff] %vm409, 0.0
          %411 = vst.msk [vmem:[#allocation2 + $0x8] sm:$0xff] %vm409, 0.0
        $region72: #{tpu_custom_call.1} parent=43 // pred_fallthru
          _
        %v412 = vld [vmem:[%s332] sm:$0xf]
        %v413 = vld [vmem:[%s332 + $0x4] sm:$0xf]
        %v414 = vld [vmem:[%s350] sm:$0xf]
        %v415 = vld [vmem:[%s350 + $0x4] sm:$0xf]
        %v416 = vld [vmem:[%s350 + $0x8] sm:$0xf]
        %v417 = vld [vmem:[%s350 + $0xc] sm:$0xf]
        %v420 = vunpack.c.l.b16 %v412
        %v421 = vunpack.c.l.b16 %v413
        %v422 = vpack.c.b16 %v421, %v420
        %vm423 = vcmask 64512
        %v425 = vsel %vm423, %v422, 0
        %vm427 = vcmask 1043456
        %v429 = vsel %vm427, %v414, 0
        %431 = vmatprep.subr.bf16.mxu0 0
        %432 = vmatpush1.bf16.msra.mxu0 %v429
        %433 = vmatprep.subr.bf16.mxu0 0
        %434 = vmatpush1.bf16.msra.mxu0 0
        %435 = vmatprep.subr.bf16.mxu0 0
        %436 = vmatpush1.bf16.msra.mxu0 0
        %437 = vmatprep.subr.bf16.mxu0 0
        %438 = vmatpush1.bf16.msra.mxu0 0
        %439 = vmatprep.subr.bf16.mxu0 0
        %440 = vmatpush1.bf16.msra.mxu0 0
        %441 = vmatprep.subr.bf16.mxu0 0
        %442 = vmatpush1.bf16.msra.mxu0 0
        %443 = vmatprep.subr.bf16.mxu0 0
        %444 = vmatpush1.bf16.msra.mxu0 0
        %445 = vmatprep.subr.bf16.mxu0 0
        %446 = vmatpush1.bf16.msra.mxu0 0
        %447 = vmatprep.subr.bf16.mxu0 0
        %448 = vmatpush1.bf16.msra.mxu0 0
        %449 = vmatprep.subr.bf16.mxu0 0
        %450 = vmatpush1.bf16.msra.mxu0 0
        %451 = vmatprep.subr.bf16.mxu0 0
        %452 = vmatpush1.bf16.msra.mxu0 0
        %453 = vmatprep.subr.bf16.mxu0 0
        %454 = vmatpush1.bf16.msra.mxu0 0
        %455 = vmatprep.subr.bf16.mxu0 0
        %456 = vmatpush1.bf16.msra.mxu0 0
        %457 = vmatprep.subr.bf16.mxu0 0
        %458 = vmatpush1.bf16.msra.mxu0 0
        %459 = vmatprep.subr.bf16.mxu0 0
        %460 = vmatpush1.bf16.msra.mxu0 0
        %461 = vmatprep.subr.bf16.mxu0 0
        %462 = vmatpush1.bf16.msra.mxu0 0
        %463 = vmatprep.mubr.bf16.mxu0 0
        %464 = vmatmul.mubr.bf16.gmra.mrb[0].mxu0 %v425
        %v465 = vpop.f32.mrb[0].mxu0
        %v466 = vadd.f32 0.0, %v465
        %v467 = vpop.f32.mrb[0].mxu0
        %v468 = vpop.f32.mrb[0].mxu0
        %v469 = vadd.f32 0.0, %v468
        %v470 = vpop.f32.mrb[0].mxu0
        %471 = vdwg.mxu0
        %472 = vrot.lane.b32.xlu0 %v422, 120
        %v473 = vpop.permute.xlu0 %472
        %v475 = vsel %vm423, %v473, 0
        %v478 = vsel %vm427, %v415, 0
        %480 = vmatprep.subr.bf16.mxu0 0
        %481 = vmatpush1.bf16.msra.mxu0 %v478
        %482 = vmatprep.subr.bf16.mxu0 0
        %483 = vmatpush1.bf16.msra.mxu0 0
        %484 = vmatprep.subr.bf16.mxu0 0
        %485 = vmatpush1.bf16.msra.mxu0 0
        %486 = vmatprep.subr.bf16.mxu0 0
        %487 = vmatpush1.bf16.msra.mxu0 0
        %488 = vmatprep.subr.bf16.mxu0 0
        %489 = vmatpush1.bf16.msra.mxu0 0
        %490 = vmatprep.subr.bf16.mxu0 0
        %491 = vmatpush1.bf16.msra.mxu0 0
        %492 = vmatprep.subr.bf16.mxu0 0
        %493 = vmatpush1.bf16.msra.mxu0 0
        %494 = vmatprep.subr.bf16.mxu0 0
        %495 = vmatpush1.bf16.msra.mxu0 0
        %496 = vmatprep.subr.bf16.mxu0 0
        %497 = vmatpush1.bf16.msra.mxu0 0
        %498 = vmatprep.subr.bf16.mxu0 0
        %499 = vmatpush1.bf16.msra.mxu0 0
        %500 = vmatprep.subr.bf16.mxu0 0
        %501 = vmatpush1.bf16.msra.mxu0 0
        %502 = vmatprep.subr.bf16.mxu0 0
        %503 = vmatpush1.bf16.msra.mxu0 0
        %504 = vmatprep.subr.bf16.mxu0 0
        %505 = vmatpush1.bf16.msra.mxu0 0
        %506 = vmatprep.subr.bf16.mxu0 0
        %507 = vmatpush1.bf16.msra.mxu0 0
        %508 = vmatprep.subr.bf16.mxu0 0
        %509 = vmatpush1.bf16.msra.mxu0 0
        %510 = vmatprep.subr.bf16.mxu0 0
        %511 = vmatpush1.bf16.msra.mxu0 0
        %512 = vmatprep.mubr.bf16.mxu0 0
        %513 = vmatmul.mubr.bf16.gmra.mrb[0].mxu0 %v475
        %v514 = vpop.f32.mrb[0].mxu0
        %v515 = vadd.f32 0.0, %v514
        %v516 = vpop.f32.mrb[0].mxu0
        %v517 = vpop.f32.mrb[0].mxu0
        %v518 = vadd.f32 0.0, %v517
        %v519 = vpop.f32.mrb[0].mxu0
        %520 = vdwg.mxu0
        %521 = vrot.lane.b32.xlu0 %v422, 112
        %v522 = vpop.permute.xlu0 %521
        %v524 = vsel %vm423, %v522, 0
        %v527 = vsel %vm427, %v416, 0
        %529 = vmatprep.subr.bf16.mxu0 0
        %530 = vmatpush1.bf16.msra.mxu0 %v527
        %531 = vmatprep.subr.bf16.mxu0 0
        %532 = vmatpush1.bf16.msra.mxu0 0
        %533 = vmatprep.subr.bf16.mxu0 0
        %534 = vmatpush1.bf16.msra.mxu0 0
        %535 = vmatprep.subr.bf16.mxu0 0
        %536 = vmatpush1.bf16.msra.mxu0 0
        %537 = vmatprep.subr.bf16.mxu0 0
        %538 = vmatpush1.bf16.msra.mxu0 0
        %539 = vmatprep.subr.bf16.mxu0 0
        %540 = vmatpush1.bf16.msra.mxu0 0
        %541 = vmatprep.subr.bf16.mxu0 0
        %542 = vmatpush1.bf16.msra.mxu0 0
        %543 = vmatprep.subr.bf16.mxu0 0
        %544 = vmatpush1.bf16.msra.mxu0 0
        %545 = vmatprep.subr.bf16.mxu0 0
        %546 = vmatpush1.bf16.msra.mxu0 0
        %547 = vmatprep.subr.bf16.mxu0 0
        %548 = vmatpush1.bf16.msra.mxu0 0
        %549 = vmatprep.subr.bf16.mxu0 0
        %550 = vmatpush1.bf16.msra.mxu0 0
        %551 = vmatprep.subr.bf16.mxu0 0
        %552 = vmatpush1.bf16.msra.mxu0 0
        %553 = vmatprep.subr.bf16.mxu0 0
        %554 = vmatpush1.bf16.msra.mxu0 0
        %555 = vmatprep.subr.bf16.mxu0 0
        %556 = vmatpush1.bf16.msra.mxu0 0
        %557 = vmatprep.subr.bf16.mxu0 0
        %558 = vmatpush1.bf16.msra.mxu0 0
        %559 = vmatprep.subr.bf16.mxu0 0
        %560 = vmatpush1.bf16.msra.mxu0 0
        %561 = vmatprep.mubr.bf16.mxu0 0
        %562 = vmatmul.mubr.bf16.gmra.mrb[0].mxu0 %v524
        %v563 = vpop.f32.mrb[0].mxu0
        %v564 = vadd.f32 0.0, %v563
        %v565 = vpop.f32.mrb[0].mxu0
        %v566 = vpop.f32.mrb[0].mxu0
        %v567 = vadd.f32 0.0, %v566
        %v568 = vpop.f32.mrb[0].mxu0
        %569 = vdwg.mxu0
        %570 = vrot.lane.b32.xlu0 %v422, 104
        %v571 = vpop.permute.xlu0 %570
        %v573 = vsel %vm423, %v571, 0
        %v576 = vsel %vm427, %v417, 0
        %578 = vmatprep.subr.bf16.mxu0 0
        %579 = vmatpush1.bf16.msra.mxu0 %v576
        %580 = vmatprep.subr.bf16.mxu0 0
        %581 = vmatpush1.bf16.msra.mxu0 0
        %582 = vmatprep.subr.bf16.mxu0 0
        %583 = vmatpush1.bf16.msra.mxu0 0
        %584 = vmatprep.subr.bf16.mxu0 0
        %585 = vmatpush1.bf16.msra.mxu0 0
        %586 = vmatprep.subr.bf16.mxu0 0
        %587 = vmatpush1.bf16.msra.mxu0 0
        %588 = vmatprep.subr.bf16.mxu0 0
        %589 = vmatpush1.bf16.msra.mxu0 0
        %590 = vmatprep.subr.bf16.mxu0 0
        %591 = vmatpush1.bf16.msra.mxu0 0
        %592 = vmatprep.subr.bf16.mxu0 0
        %593 = vmatpush1.bf16.msra.mxu0 0
        %594 = vmatprep.subr.bf16.mxu0 0
        %595 = vmatpush1.bf16.msra.mxu0 0
        %596 = vmatprep.subr.bf16.mxu0 0
        %597 = vmatpush1.bf16.msra.mxu0 0
        %598 = vmatprep.subr.bf16.mxu0 0
        %599 = vmatpush1.bf16.msra.mxu0 0
        %600 = vmatprep.subr.bf16.mxu0 0
        %601 = vmatpush1.bf16.msra.mxu0 0
        %602 = vmatprep.subr.bf16.mxu0 0
        %603 = vmatpush1.bf16.msra.mxu0 0
        %604 = vmatprep.subr.bf16.mxu0 0
        %605 = vmatpush1.bf16.msra.mxu0 0
        %606 = vmatprep.subr.bf16.mxu0 0
        %607 = vmatpush1.bf16.msra.mxu0 0
        %608 = vmatprep.subr.bf16.mxu0 0
        %609 = vmatpush1.bf16.msra.mxu0 0
        %610 = vmatprep.mubr.bf16.mxu0 0
        %611 = vmatmul.mubr.bf16.gmra.mrb[0].mxu0 %v573
        %v612 = vpop.f32.mrb[0].mxu0
        %v613 = vadd.f32 0.0, %v612
        %v614 = vpop.f32.mrb[0].mxu0
        %v615 = vpop.f32.mrb[0].mxu0
        %v616 = vadd.f32 0.0, %v615
        %v617 = vpop.f32.mrb[0].mxu0
        %618 = vdwg.mxu0
        %v619 = vld [vmem:[#allocation2] sm:$0xff]
        %v620 = vld [vmem:[#allocation2 + $0x8] sm:$0xff]
        %623 = vrot.lane.b32.xlu0 %v515, 8
        %v624 = vpop.permute.xlu0 %623
        %625 = vrot.lane.b32.xlu0 %v518, 8
        %v626 = vpop.permute.xlu0 %625
        %631 = vrot.lane.b32.xlu0 %v564, 16
        %v632 = vpop.permute.xlu0 %631
        %633 = vrot.lane.b32.xlu0 %v567, 16
        %v634 = vpop.permute.xlu0 %633
        %639 = vrot.lane.b32.xlu0 %v613, 24
        %v640 = vpop.permute.xlu0 %639
        %641 = vrot.lane.b32.xlu0 %v616, 24
        %v642 = vpop.permute.xlu0 %641
        %v645 = vsel %vm423, %v466, %v624
        %v646 = vsel %vm423, %v469, %v626
        %vm647 = vcmask 130048
        %v648 = vsel %vm647, %v645, %v632
        %v649 = vsel %vm647, %v646, %v634
        %vm650 = vcmask 195584
        %v651 = vsel %vm650, %v648, %v640
        %v652 = vsel %vm650, %v649, %v642
        %v653 = vadd.f32 %v619, %v651
        %v654 = vadd.f32 %v620, %v652
        %vm655 = vcmask 261120
        %656 = vst.msk [vmem:[#allocation2] sm:$0xff] %vm655, %v653
        %657 = vst.msk [vmem:[#allocation2 + $0x8] sm:$0xff] %vm655, %v654
        %p658 = scmp.eq.s32.totalorder %s33, 15
        // Predicated region
        $region73: #{tpu_custom_call.1} parent=43 // pred_check
          %p659 = pneg %p658
        $region74: #{tpu_custom_call.1} parent=43 // pred_check_branch
          %661 = sbr.rel (%p659) target = $region76
        $region75: #{tpu_custom_call.1} parent=43 // pred_region
          %v662 = vld [vmem:[#allocation2] sm:$0xff]
          %v663 = vld [vmem:[#allocation2 + $0x8] sm:$0xff]
          %v664 = vld [vmem:[#allocation9] sm:$0x1]
          %v666 = vlaneseq
          %v667 = vshrl.u32 %v666, 7
          %v668 = vsub.s32 0, %v667
          %v669 = vrot.slane %v664, %v668
          %v671 = vadd.f32 %v662, %v669
          %v672 = vadd.f32 %v663, %v669
          %v673 = vmul.f32 %v671, 0.5
          %v674 = vmul.f32 %v672, 0.5
          %v675 = vmul.f32 %v671, 0.044715
          %v676 = vmul.f32 %v672, 0.044715
          %v677 = vmul.f32 %v675, %v671
          %v678 = vmul.f32 %v676, %v672
          %v679 = vmul.f32 %v677, %v671
          %v680 = vmul.f32 %v678, %v672
          %v681 = vadd.f32 %v671, %v679
          %v682 = vadd.f32 %v672, %v680
          %v683 = vmul.f32 %v681, 0.7978846
          %v684 = vmul.f32 %v682, 0.7978846
          %v685 = vtanh.pop %v683
          %v686 = vtanh.pop %v684
          %v687 = vadd.f32 %v685, 1.0
          %v688 = vadd.f32 %v686, 1.0
          %v689 = vmul.f32 %v673, %v687
          %v690 = vmul.f32 %v674, %v688
          %v691 = vld [vmem:[%s341] sm:$0xff]
          %v692 = vld [vmem:[%s341 + $0x8] sm:$0xff]
          %v693 = vadd.f32 %v691, %v689
          %v694 = vadd.f32 %v692, %v690
          %v695 = vld [vmem:[#allocation11] sm:$0x1]
          %v696 = vld [vmem:[#allocation12] sm:$0x1]
          %v697 = vsel %vm655, %v693, 0.0
          %698 = vadd.xlane.f32.xlu0 %v697
          %v699 = vpop.xlane.xlu0 %698
          %v700 = vsel %vm655, %v694, 0.0
          %701 = vadd.xlane.f32.xlu0 %v700
          %v702 = vpop.xlane.xlu0 %701
          %v703 = vrcp.pop 32.0
          %v704 = vmul.f32 %v699, %v703
          %v705 = vmul.f32 %v702, %v703
          %v706 = vsub.f32 %v693, %v704
          %v707 = vsub.f32 %v694, %v705
          %v708 = vmul.f32 %v706, %v706
          %v709 = vmul.f32 %v707, %v707
          %v710 = vsel %vm655, %v708, 0.0
          %711 = vadd.xlane.f32.xlu0 %v710
          %v712 = vpop.xlane.xlu0 %711
          %v713 = vsel %vm655, %v709, 0.0
          %714 = vadd.xlane.f32.xlu0 %v713
          %v715 = vpop.xlane.xlu0 %714
          %v716 = vmul.f32 %v712, %v703
          %v717 = vmul.f32 %v715, %v703
          %v718 = vadd.f32 %v716, 1e-05
          %v719 = vadd.f32 %v717, 1e-05
          %v720 = vrsqrt.pop %v718
          %v721 = vrsqrt.pop %v719
          %v722 = vmul.f32 %v706, %v720
          %v723 = vmul.f32 %v707, %v721
          %v725 = vlaneseq
          %v726 = vshrl.u32 %v725, 7
          %v727 = vsub.s32 0, %v726
          %v728 = vrot.slane %v695, %v727
          %v730 = vmul.f32 %v722, %v728
          %v731 = vmul.f32 %v723, %v728
          %v733 = vlaneseq
          %v734 = vshrl.u32 %v733, 7
          %v735 = vsub.s32 0, %v734
          %v736 = vrot.slane %v696, %v735
          %v738 = vadd.f32 %v730, %v736
          %v739 = vadd.f32 %v731, %v736
          %740 = vst.msk [vmem:[%s400] sm:$0xff] %vm655, %v738
          %741 = vst.msk [vmem:[%s400 + $0x8] sm:$0xff] %vm655, %v739
        $region76: #{tpu_custom_call.1} parent=43 // pred_fallthru
          _
        %s742 = sand.u32 %s191, 1
        %s743 = scalar_lea.sflag [#allocation5], %s742
        %s744 = sand.u32 %s191, 1
        %s745 = smul.addr %s744, 16
        %s746 = scalar_lea.vmem [#allocation14], %s745
        // Predicated region
        $region77: #{tpu_custom_call.1} parent=43 // pred_check
          %p747 = pneg %p201
        $region78: #{tpu_custom_call.1} parent=43 // pred_check_branch
          %749 = sbr.rel (%p747) target = $region80
        $region79: #{tpu_custom_call.1} parent=43 // pred_region
          %s750 = smul.u32 2, %s32
          %s752 = ssub.s32 256, 256
          %753 = vsyncadd %s743, %s752
          %s754 = smul.addr %s750, 128
          %s755 = scalar_lea.hbm %s6, %s754
          %s756 = sshll.u32 %s746, 4
          %s757 = int_to_ptr.vmem [resolvable:$true] %s756
          %762 = dma.vmem_to_hbm [thread:$0]  %s757, 256, %s755, %s743, 128, 128, 8
        $region80: #{tpu_custom_call.1} parent=43 // pred_fallthru
          _
      $region44: #{tpu_custom_call.1} parent=5 // pred_fallthru
        _
      %p763 = scmp.le.s32.totalorder 2, %s23
      // Predicated region
      $region81: #{tpu_custom_call.1} parent=5 // pred_check
        %p764 = pneg %p763
      $region82: #{tpu_custom_call.1} parent=5 // pred_check_branch
        %766 = sbr.rel (%p764) target = $region84
      $region83: #{tpu_custom_call.1} parent=5 // pred_region
        %s767 = ssub.s32 %s23, 2
        // Predicated region
        $region85: #{tpu_custom_call.1} parent=83 // pred_check
          %p768 = pneg %p207
        $region86: #{tpu_custom_call.1} parent=83 // pred_check_branch
          %770 = sbr.rel (%p768) target = $region88
        $region87: #{tpu_custom_call.1} parent=83 // pred_region
          %s771 = sand.u32 %s192, 1
          %s772 = scalar_lea.sflag [#allocation5], %s771
          %s773 = sand.u32 %s192, 1
          %s774 = smul.addr %s773, 16
          %s775 = scalar_lea.vmem [#allocation14], %s774
          %776 = dma.done %s772, 256
        $region88: #{tpu_custom_call.1} parent=83 // pred_fallthru
          _
      $region84: #{tpu_custom_call.1} parent=5 // pred_fallthru
        _
    $region6: #{tpu_custom_call.1} parent=1 // loop_footer
      %s27 = sadd.s32 1, %s23
    $region7: #{tpu_custom_call.1} parent=1 // loop_footer_branch
      %22 = sbr.rel target = $region3
    $region8: #{tpu_custom_call.1} parent=1 // loop_exit
      _
    %777 = vsyncpa [#allocation4], 1
    %s778 = scalar_lea.sflag [#allocation4], 1
    %779 = vsyncpa %s778, 1
    %780 = vsyncpa [#allocation7], 1
    %s781 = scalar_lea.sflag [#allocation7], 1
    %782 = vsyncpa %s781, 1
    %783 = vsyncpa [#allocation10], 1
    %784 = vsyncpa [#allocation13], 1
    %785 = vsyncpa [#allocation5], 1
    %s786 = scalar_lea.sflag [#allocation5], 1
    %787 = vsyncpa %s786, 1

</llo_original>
